<compile_context>
chip_gen: v7x
topology: tpu7x:2x2x1
jax: 0.10.0
libtpu: 0.0.40
codegen_flags: <defaults>
</compile_context>

<pallas_src>
import jax
import jax.numpy as jnp
from jax.experimental import pallas as pl
from jax.experimental.pallas import tpu as pltpu

LANE = 128
_VMEM_LIMIT = 48 * 1024 * 1024   # safe on v7x (64 MiB physical), plenty on v5e/v6e
_TILE_TARGET = 4096              # HW rows per grid step (multiple of 16)


def _round_up(x, m):
    return (x + m - 1) // m * m


def _choose_tiling(hw, target=_TILE_TARGET, mult=16):
    """Pick (tile_rows, padded_hw): tile is a multiple of `mult`, <= ~target,
    and padded_hw = tile * n_tiles with minimal zero-padding."""
    n_tiles = max(1, (hw + target - 1) // target)
    tile = _round_up(-(-hw // n_tiles), mult)
    return tile, tile * n_tiles


def _pad_lanes(a, to, axis=-1):
    pad = to - a.shape[axis]
    if pad == 0:
        return a
    widths = [(0, 0)] * a.ndim
    widths[axis] = (0, pad)
    return jnp.pad(a, widths)


def _pad_rows(a, to_rows):
    pad = to_rows - a.shape[1]
    if pad == 0:
        return a
    return jnp.pad(a, ((0, 0), (0, pad), (0, 0)))


# ---------------------------------------------------------------------------
# Pallas kernels
# ---------------------------------------------------------------------------
def _cbr_pool_kernel(high_ref, w_cbr_ref, bn_shift_ref, x_ref, pooled_ref,
                     acc_ref):
    """cbr branch (1x1 conv w/ BN scale folded into the weight, + shift, ReLU)
    fused with the global-average-pool row-sum for the scale branch.

    Grid = (N, HW tiles); HW axis is a reduction for the pooled output
    (P3 accumulator in a VMEM scratch, stored on the last tile)."""
    t = pl.program_id(1)

    @pl.when(t == 0)
    def _():
        acc_ref[...] = jnp.zeros_like(acc_ref)

    h = high_ref[0]                                               # (T, C_high) bf16
    acc_ref[...] += jnp.sum(h.astype(jnp.float32), axis=0, keepdims=True)

    y = jnp.dot(h, w_cbr_ref[...], preferred_element_type=jnp.float32)
    y = jnp.maximum(y + bn_shift_ref[...], 0.0)                   # f32 elementwise
    x_ref[0] = y.astype(x_ref.dtype)                              # (T, inter_p) bf16

    @pl.when(t == pl.num_programs(1) - 1)
    def _():
        pooled_ref[0] = acc_ref[...]                              # (1, C_high) f32


def _classifier_kernel(low_ref, xup_ref, w_lc_ref, w_hc_ref, bias_ref, out_ref):
    """low_classifier(low) + high_classifier(x_up).  The sigmoid gate s is
    pre-folded into the per-batch w_hc; biases are pre-summed into one vector.
    Output is written at its true num_classes width (no lane padding)."""
    o = jnp.dot(low_ref[0], w_lc_ref[...], preferred_element_type=jnp.float32)
    o += jnp.dot(xup_ref[0], w_hc_ref[0], preferred_element_type=jnp.float32)
    out_ref[0] = (o + bias_ref[...]).astype(out_ref.dtype)        # (T, ncls)


# ---------------------------------------------------------------------------
# pallas_call wrappers
# ---------------------------------------------------------------------------
def lraspp_cbr_pool(high_flat, w_cbr_p, bn_shift_p, *, tile_hw):
    N, HWp, C_high = high_flat.shape
    inter_p = w_cbr_p.shape[1]
    n_tiles = HWp // tile_hw
    return pl.pallas_call(
        _cbr_pool_kernel,
        out_shape=(jax.ShapeDtypeStruct((N, HWp, inter_p), jnp.bfloat16),
                   jax.ShapeDtypeStruct((N, 1, C_high), jnp.float32)),
        grid=(N, n_tiles),
        in_specs=[
            pl.BlockSpec((1, tile_hw, C_high), lambda n, t: (n, t, 0)),
            pl.BlockSpec((C_high, inter_p), lambda n, t: (0, 0)),
            pl.BlockSpec((1, inter_p), lambda n, t: (0, 0)),
        ],
        out_specs=(
            pl.BlockSpec((1, tile_hw, inter_p), lambda n, t: (n, t, 0)),
            pl.BlockSpec((1, 1, C_high), lambda n, t: (n, 0, 0)),
        ),
        scratch_shapes=[pltpu.VMEM((1, C_high), jnp.float32)],
        compiler_params=pltpu.CompilerParams(
            dimension_semantics=("parallel", "arbitrary"),
            vmem_limit_bytes=_VMEM_LIMIT),
    )(high_flat, w_cbr_p, bn_shift_p)


def lraspp_classifier(low_flat, xup_flat, w_lc, w_hc_scaled, bias, *, tile_hw):
    N, HWp, C_low = low_flat.shape
    inter_p = xup_flat.shape[-1]
    ncls = w_lc.shape[1]
    n_tiles = HWp // tile_hw
    return pl.pallas_call(
        _classifier_kernel,
        out_shape=jax.ShapeDtypeStruct((N, HWp, ncls), jnp.float32),
        grid=(N, n_tiles),
        in_specs=[
            pl.BlockSpec((1, tile_hw, C_low), lambda n, t: (n, t, 0)),
            pl.BlockSpec((1, tile_hw, inter_p), lambda n, t: (n, t, 0)),
            pl.BlockSpec((C_low, ncls), lambda n, t: (0, 0)),
            pl.BlockSpec((1, inter_p, ncls), lambda n, t: (n, 0, 0)),
            pl.BlockSpec((1, ncls), lambda n, t: (0, 0)),
        ],
        out_specs=pl.BlockSpec((1, tile_hw, ncls), lambda n, t: (n, t, 0)),
        compiler_params=pltpu.CompilerParams(
            dimension_semantics=("parallel", "parallel"),
            vmem_limit_bytes=_VMEM_LIMIT),
    )(low_flat, xup_flat, w_lc, w_hc_scaled, bias)


# ---------------------------------------------------------------------------
# Glue: simple deterministic backbone + full LRASPP forward
# ---------------------------------------------------------------------------
def _avg_pool_nchw(x, k):
    N, C, H, W = x.shape
    return x.reshape(N, C, H // k, k, W // k, k).mean(axis=(3, 5))


def backbone_nhwc(x, p):
    # Synthetic deterministic backbone producing {'low', 'high'} feature maps,
    # emitted directly in channels-last layout (no NCHW<->NHWC transposes).
    low_in = _avg_pool_nchw(x, 2)                  # (N, Cin, H/2, W/2)
    high_in = _avg_pool_nchw(x, 4)                 # (N, Cin, H/4, W/4)
    low = jnp.einsum("nchw,cd->nhwd", low_in, p["bb_low_w"])
    high = jnp.einsum("nchw,cd->nhwd", high_in, p["bb_high_w"])
    return {"low": low, "high": high}


def lraspp_forward(x, p):
    feats = backbone_nhwc(x, p)
    low, high = feats["low"], feats["high"]        # channels-last, f32
    N, Hl, Wl, C_low = low.shape
    _, Hh, Wh, C_high = high.shape
    inter = p["w_cbr"].shape[1]
    num_classes = p["w_lc"].shape[1]
    inter_p = _round_up(inter, LANE)

    # ----- fold BatchNorm (eval mode) scale into the cbr weight -----
    eps = 1e-5
    inv_std = p["bn_gamma"] * jax.lax.rsqrt(p["bn_var"] + eps)
    w_cbr_folded = p["w_cbr"] * inv_std[None, :]
    bn_shift = p["bn_beta"] - p["bn_mean"] * inv_std

    # ----- weight prep: lane-pad "inter" to 128, cast MXU operands to bf16 ---
    # Padded cbr lanes: zero weight cols + zero shift + ReLU -> exactly 0;
    # w_hc padded rows are zero, so padded lanes never leak into the output.
    w_cbr_p = _pad_lanes(w_cbr_folded, inter_p).astype(jnp.bfloat16)
    bn_shift_p = _pad_lanes(bn_shift.reshape(1, -1), inter_p)        # f32
    w_scale_p = _pad_lanes(p["w_scale"], inter_p)                    # f32 (glue only)
    w_lc_b = p["w_lc"].astype(jnp.bfloat16)                          # (C_low, ncls)
    bias = (p["b_lc"] + p["b_hc"]).reshape(1, -1)                    # f32 (1, ncls)

    # ----- flatten spatial, pad HW to a tile multiple, bf16 activations -----
    HWh, HWl = Hh * Wh, Hl * Wl
    tile_h, HWh_p = _choose_tiling(HWh)
    tile_l, HWl_p = _choose_tiling(HWl)
    high_flat = _pad_rows(high.reshape(N, HWh, C_high), HWh_p).astype(jnp.bfloat16)
    low_flat = _pad_rows(low.reshape(N, HWl, C_low), HWl_p).astype(jnp.bfloat16)

    # ----- kernel 1: cbr conv (+ fused global-average-pool row sum) -----
    x_cbr, pooled_sum = lraspp_cbr_pool(high_flat, w_cbr_p, bn_shift_p,
                                        tile_hw=tile_h)
    # x_cbr: (N, HWh_p, inter_p) bf16; pooled_sum: (N, 1, C_high) f32
    # (padded HW rows are zero so they add nothing to pooled_sum)

    # ----- scale branch finish (tiny, XLA) + gate fold into w_hc -----
    pooled = pooled_sum[:, 0, :] * (1.0 / HWh)                       # (N, C_high)
    s = jax.nn.sigmoid(pooled @ w_scale_p)                           # (N, inter_p)
    w_hc_p = jnp.pad(p["w_hc"], ((0, inter_p - inter), (0, 0)))      # (inter_p, ncls)
    w_hc_scaled = (s[:, :, None] * w_hc_p[None]).astype(jnp.bfloat16)  # (N, inter_p, ncls)

    # ----- bilinear upsample (half-pixel centers), channels-last, bf16 -----
    # Upsample commutes with the per-channel gate, so we upsample the
    # un-gated cbr output and apply the gate via w_hc_scaled above.
    x_up = jax.image.resize(x_cbr[:, :HWh, :].reshape(N, Hh, Wh, inter_p),
                            (N, Hl, Wl, inter_p), method="bilinear")
    xup_flat = _pad_rows(x_up.reshape(N, HWl, inter_p), HWl_p).astype(jnp.bfloat16)

    # ----- kernel 2: low_classifier + gated high_classifier, fused add -----
    out_flat = lraspp_classifier(low_flat, xup_flat, w_lc_b, w_hc_scaled, bias,
                                 tile_hw=tile_l)                     # (N, HWl_p, ncls) f32
    out_nhwc = out_flat[:, :HWl, :].reshape(N, Hl, Wl, num_classes)

    # ----- LRASPP: final interpolate to input spatial size -----
    H, W = x.shape[-2], x.shape[-1]
    out = jax.image.resize(out_nhwc, (N, H, W, num_classes), method="bilinear")
    return {"out": out.transpose(0, 3, 1, 2)}                        # NCHW output


def make_params(key, in_channels, low_channels, high_channels, num_classes,
                inter_channels):
    ks = jax.random.split(key, 12)
    p = {}
    p["bb_low_w"] = 0.2 * jax.random.normal(ks[0], (in_channels, low_channels), jnp.float32)
    p["bb_high_w"] = 0.2 * jax.random.normal(ks[1], (in_channels, high_channels), jnp.float32)
    # cbr: Conv2d(high, inter, 1, bias=False) + BatchNorm2d(inter) + ReLU
    p["w_cbr"] = 0.2 * jax.random.normal(ks[2], (high_channels, inter_channels), jnp.float32)
    p["bn_gamma"] = 1.0 + 0.1 * jax.random.normal(ks[3], (inter_channels,), jnp.float32)
    p["bn_beta"] = 0.1 * jax.random.normal(ks[4], (inter_channels,), jnp.float32)
    p["bn_mean"] = 0.05 * jax.random.normal(ks[5], (inter_channels,), jnp.float32)
    p["bn_var"] = jnp.abs(1.0 + 0.1 * jax.random.normal(ks[6], (inter_channels,), jnp.float32))
    # scale: AdaptiveAvgPool2d(1) + Conv2d(high, inter, 1, bias=False) + Sigmoid
    p["w_scale"] = 0.2 * jax.random.normal(ks[7], (high_channels, inter_channels), jnp.float32)
    # low_classifier / high_classifier: Conv2d(.., num_classes, 1) with bias
    p["w_lc"] = 0.2 * jax.random.normal(ks[8], (low_channels, num_classes), jnp.float32)
    p["b_lc"] = 0.1 * jax.random.normal(ks[9], (num_classes,), jnp.float32)
    p["w_hc"] = 0.2 * jax.random.normal(ks[10], (inter_channels, num_classes), jnp.float32)
    p["b_hc"] = 0.1 * jax.random.normal(ks[11], (num_classes,), jnp.float32)
    return p


if __name__ == "__main__":
    # Small shapes consistent with the module:
    #   input NCHW (2, 3, 16, 16); low feats 8x8x8; high feats 4x4x16.
    # inter_channels=128 keeps the lane dim naturally dense (torchvision's
    # LRASPP-MobileNetV3 also uses 128).
    N, Cin, H, W = 2, 3, 16, 16
    low_channels, high_channels = 8, 16
    num_classes, inter_channels = 6, 128

    key = jax.random.PRNGKey(0)
    k_x, k_p = jax.random.split(key)
    x = jax.random.normal(k_x, (N, Cin, H, W), jnp.float32)
    params = make_params(k_p, Cin, low_channels, high_channels,
                         num_classes, inter_channels)

    fwd = jax.jit(lraspp_forward)
    result = fwd(x, params)
    out = jax.block_until_ready(result["out"])
    assert out.shape == (N, num_classes, H, W), out.shape
    assert jnp.all(jnp.isfinite(out))
    print("KERNEL_OK")
</pallas_src>

<mosaic_0001>
module attributes {stable_mosaic.version = 11 : i64} {
  func.func @_cbr_pool_kernel(%arg0: i32, %arg1: i32, %arg2: memref<1x16x16xbf16, #tpu.memory_space<vmem>>, %arg3: memref<16x128xbf16, #tpu.memory_space<vmem>>, %arg4: memref<1x128xf32, #tpu.memory_space<vmem>>, %arg5: memref<1x16x128xbf16, #tpu.memory_space<vmem>>, %arg6: memref<1x1x16xf32, #tpu.memory_space<vmem>>, %arg7: memref<1x16xf32, #tpu.memory_space<vmem>>) attributes {dimension_semantics = [#tpu.dimension_semantics<parallel>, #tpu.dimension_semantics<arbitrary>], iteration_bounds = array<i64: 2, 1>, scalar_prefetch = 0 : i64, scratch_operands = 1 : i64, tpu.core_type = #tpu.core_type<tc>, window_params = [{transform_indices = @transform_0, window_bounds = array<i64: 1, 16, 16>}, {pipeline_mode = #tpu.pipeline_mode<synchronous>, transform_indices = @transform_1, window_bounds = array<i64: 16, 128>}, {pipeline_mode = #tpu.pipeline_mode<synchronous>, transform_indices = @transform_2, window_bounds = array<i64: 1, 128>}, {transform_indices = @transform_3, window_bounds = array<i64: 1, 16, 128>}, {transform_indices = @transform_4, window_bounds = array<i64: 1, 1, 16>}]} {
    %c0_i32 = arith.constant 0 : i32
    %0 = arith.cmpi eq, %arg1, %c0_i32 : i32
    %1 = arith.extui %0 : i1 to i32
    %c0_i32_0 = arith.constant 0 : i32
    %2 = arith.cmpi ne, %1, %c0_i32_0 : i32
    scf.if %2 {
      %cst_18 = arith.constant 0.000000e+00 : f32
      %25 = vector.broadcast %cst_18 : f32 to vector<1x16xf32>
      %c0_19 = arith.constant 0 : index
      %c0_20 = arith.constant 0 : index
      %26 = vector.load %arg7[%c0_19, %c0_20] : memref<1x16xf32, #tpu.memory_space<vmem>>, vector<1x16xf32>
      tpu.vector_store %arg7[%c0_19, %c0_20], %25 {strides = array<i32>} : memref<1x16xf32, #tpu.memory_space<vmem>>, vector<1x16xf32>,
    } else {
    }
    %c0 = arith.constant 0 : index
    %c0_1 = arith.constant 0 : index
    %c0_2 = arith.constant 0 : index
    %3 = vector.load %arg2[%c0, %c0_1, %c0_2] : memref<1x16x16xbf16, #tpu.memory_space<vmem>>, vector<1x16x16xbf16>
    %4 = vector.shape_cast %3 : vector<1x16x16xbf16> to vector<16x16xbf16>
    %c0_3 = arith.constant 0 : index
    %c0_4 = arith.constant 0 : index
    %5 = vector.load %arg7[%c0_3, %c0_4] : memref<1x16xf32, #tpu.memory_space<vmem>>, vector<1x16xf32>
    %6 = arith.extf %4 : vector<16x16xbf16> to vector<16x16xf32>
    %cst = arith.constant dense<0.000000e+00> : vector<16xf32>
    %7 = vector.multi_reduction <add>, %6, %cst [0] : vector<16x16xf32> to vector<16xf32>
    %8 = vector.shape_cast %7 : vector<16xf32> to vector<1x16xf32>
    %9 = arith.addf %5, %8 : vector<1x16xf32>
    %c0_5 = arith.constant 0 : index
    %c0_6 = arith.constant 0 : index
    %10 = vector.load %arg7[%c0_5, %c0_6] : memref<1x16xf32, #tpu.memory_space<vmem>>, vector<1x16xf32>
    tpu.vector_store %arg7[%c0_5, %c0_6], %9 {strides = array<i32>} : memref<1x16xf32, #tpu.memory_space<vmem>>, vector<1x16xf32>,
    %c0_7 = arith.constant 0 : index
    %c0_8 = arith.constant 0 : index
    %11 = vector.load %arg3[%c0_7, %c0_8] : memref<16x128xbf16, #tpu.memory_space<vmem>>, vector<16x128xbf16>
    %cst_9 = arith.constant dense<0.000000e+00> : vector<16x128xf32>
    %12 = tpu.matmul %4, %11, %cst_9 {dimension_numbers = #tpu.dot_dimension_numbers<[1], [0], [0], [1], [0, 0, 1, 1], [], []>} : vector<16x16xbf16>, vector<16x128xbf16>, vector<16x128xf32> -> vector<16x128xf32>
    %c0_10 = arith.constant 0 : index
    %c0_11 = arith.constant 0 : index
    %13 = vector.load %arg4[%c0_10, %c0_11] : memref<1x128xf32, #tpu.memory_space<vmem>>, vector<1x128xf32>
    %14 = vector.broadcast %13 : vector<1x128xf32> to vector<16x128xf32>
    %15 = arith.addf %12, %14 : vector<16x128xf32>
    %cst_12 = arith.constant 0.000000e+00 : f32
    %16 = vector.broadcast %cst_12 : f32 to vector<16x128xf32>
    %17 = arith.maximumf %15, %16 : vector<16x128xf32>
    %18 = arith.truncf %17 : vector<16x128xf32> to vector<16x128xbf16>
    %c0_13 = arith.constant 0 : index
    %c0_14 = arith.constant 0 : index
    %c0_15 = arith.constant 0 : index
    %19 = vector.load %arg5[%c0_13, %c0_14, %c0_15] : memref<1x16x128xbf16, #tpu.memory_space<vmem>>, vector<1x16x128xbf16>
    %20 = vector.shape_cast %19 : vector<1x16x128xbf16> to vector<16x128xbf16>
    %21 = vector.shape_cast %18 : vector<16x128xbf16> to vector<1x16x128xbf16>
    tpu.vector_store %arg5[%c0_13, %c0_14, %c0_15], %21 {strides = array<i32>} : memref<1x16x128xbf16, #tpu.memory_space<vmem>>, vector<1x16x128xbf16>,
    %c0_i32_16 = arith.constant 0 : i32
    %22 = arith.cmpi eq, %arg1, %c0_i32_16 : i32
    %23 = arith.extui %22 : i1 to i32
    %c0_i32_17 = arith.constant 0 : i32
    %24 = arith.cmpi ne, %23, %c0_i32_17 : i32
    scf.if %24 {
      %c0_18 = arith.constant 0 : index
      %c0_19 = arith.constant 0 : index
      %25 = vector.load %arg7[%c0_18, %c0_19] : memref<1x16xf32, #tpu.memory_space<vmem>>, vector<1x16xf32>
      %c0_20 = arith.constant 0 : index
      %c0_21 = arith.constant 0 : index
      %c0_22 = arith.constant 0 : index
      %26 = vector.load %arg6[%c0_20, %c0_21, %c0_22] : memref<1x1x16xf32, #tpu.memory_space<vmem>>, vector<1x1x16xf32>
      %27 = vector.shape_cast %26 : vector<1x1x16xf32> to vector<1x16xf32>
      %28 = vector.shape_cast %25 : vector<1x16xf32> to vector<1x1x16xf32>
      tpu.vector_store %arg6[%c0_20, %c0_21, %c0_22], %28 {strides = array<i32>} : memref<1x1x16xf32, #tpu.memory_space<vmem>>, vector<1x1x16xf32>,
    } else {
    }
    return
  }
  func.func @transform_0(%arg0: i32, %arg1: i32) -> (i32, i32, i32) {
    %c0_i32 = arith.constant 0 : i32
    %c0_i32_0 = arith.constant 0 : i32
    return %arg0, %arg1, %c0_i32 : i32, i32, i32
  }
  func.func @transform_1(%arg0: i32, %arg1: i32) -> (i32, i32) {
    %c0_i32 = arith.constant 0 : i32
    %c0_i32_0 = arith.constant 0 : i32
    %c0_i32_1 = arith.constant 0 : i32
    return %c0_i32, %c0_i32_0 : i32, i32
  }
  func.func @transform_2(%arg0: i32, %arg1: i32) -> (i32, i32) {
    %c0_i32 = arith.constant 0 : i32
    %c0_i32_0 = arith.constant 0 : i32
    %c0_i32_1 = arith.constant 0 : i32
    return %c0_i32, %c0_i32_0 : i32, i32
  }
  func.func @transform_3(%arg0: i32, %arg1: i32) -> (i32, i32, i32) {
    %c0_i32 = arith.constant 0 : i32
    %c0_i32_0 = arith.constant 0 : i32
    return %arg0, %arg1, %c0_i32 : i32, i32, i32
  }
  func.func @transform_4(%arg0: i32, %arg1: i32) -> (i32, i32, i32) {
    %c0_i32 = arith.constant 0 : i32
    %c0_i32_0 = arith.constant 0 : i32
    %c0_i32_1 = arith.constant 0 : i32
    return %arg0, %c0_i32, %c0_i32_0 : i32, i32, i32
  }
}

module attributes {stable_mosaic.version = 11 : i64} {
  func.func @_classifier_kernel(%arg0: i32, %arg1: i32, %arg2: memref<1x64x8xbf16, #tpu.memory_space<vmem>>, %arg3: memref<1x64x128xbf16, #tpu.memory_space<vmem>>, %arg4: memref<8x6xbf16, #tpu.memory_space<vmem>>, %arg5: memref<1x128x6xbf16, #tpu.memory_space<vmem>>, %arg6: memref<1x6xf32, #tpu.memory_space<vmem>>, %arg7: memref<1x64x6xf32, #tpu.memory_space<vmem>>) attributes {dimension_semantics = [#tpu.dimension_semantics<parallel>, #tpu.dimension_semantics<parallel>], iteration_bounds = array<i64: 2, 1>, scalar_prefetch = 0 : i64, scratch_operands = 0 : i64, tpu.core_type = #tpu.core_type<tc>, window_params = [{transform_indices = @transform_0, window_bounds = array<i64: 1, 64, 8>}, {transform_indices = @transform_1, window_bounds = array<i64: 1, 64, 128>}, {pipeline_mode = #tpu.pipeline_mode<synchronous>, transform_indices = @transform_2, window_bounds = array<i64: 8, 6>}, {transform_indices = @transform_3, window_bounds = array<i64: 1, 128, 6>}, {pipeline_mode = #tpu.pipeline_mode<synchronous>, transform_indices = @transform_4, window_bounds = array<i64: 1, 6>}, {transform_indices = @transform_5, window_bounds = array<i64: 1, 64, 6>}]} {
    %c0 = arith.constant 0 : index
    %c0_0 = arith.constant 0 : index
    %c0_1 = arith.constant 0 : index
    %0 = vector.load %arg2[%c0, %c0_0, %c0_1] : memref<1x64x8xbf16, #tpu.memory_space<vmem>>, vector<1x64x8xbf16>
    %1 = vector.shape_cast %0 : vector<1x64x8xbf16> to vector<64x8xbf16>
    %c0_2 = arith.constant 0 : index
    %c0_3 = arith.constant 0 : index
    %2 = vector.load %arg4[%c0_2, %c0_3] : memref<8x6xbf16, #tpu.memory_space<vmem>>, vector<8x6xbf16>
    %cst = arith.constant dense<0.000000e+00> : vector<64x6xf32>
    %3 = tpu.matmul %1, %2, %cst {dimension_numbers = #tpu.dot_dimension_numbers<[1], [0], [0], [1], [0, 0, 1, 1], [], []>} : vector<64x8xbf16>, vector<8x6xbf16>, vector<64x6xf32> -> vector<64x6xf32>
    %c0_4 = arith.constant 0 : index
    %c0_5 = arith.constant 0 : index
    %c0_6 = arith.constant 0 : index
    %4 = vector.load %arg3[%c0_4, %c0_5, %c0_6] : memref<1x64x128xbf16, #tpu.memory_space<vmem>>, vector<1x64x128xbf16>
    %5 = vector.shape_cast %4 : vector<1x64x128xbf16> to vector<64x128xbf16>
    %c0_7 = arith.constant 0 : index
    %c0_8 = arith.constant 0 : index
    %c0_9 = arith.constant 0 : index
    %6 = vector.load %arg5[%c0_7, %c0_8, %c0_9] : memref<1x128x6xbf16, #tpu.memory_space<vmem>>, vector<1x128x6xbf16>
    %7 = vector.shape_cast %6 : vector<1x128x6xbf16> to vector<128x6xbf16>
    %cst_10 = arith.constant dense<0.000000e+00> : vector<64x6xf32>
    %8 = tpu.matmul %5, %7, %cst_10 {dimension_numbers = #tpu.dot_dimension_numbers<[1], [0], [0], [1], [0, 0, 1, 1], [], []>} : vector<64x128xbf16>, vector<128x6xbf16>, vector<64x6xf32> -> vector<64x6xf32>
    %9 = arith.addf %3, %8 : vector<64x6xf32>
    %c0_11 = arith.constant 0 : index
    %c0_12 = arith.constant 0 : index
    %10 = vector.load %arg6[%c0_11, %c0_12] : memref<1x6xf32, #tpu.memory_space<vmem>>, vector<1x6xf32>
    %11 = vector.broadcast %10 : vector<1x6xf32> to vector<64x6xf32>
    %12 = arith.addf %9, %11 : vector<64x6xf32>
    %c0_13 = arith.constant 0 : index
    %c0_14 = arith.constant 0 : index
    %c0_15 = arith.constant 0 : index
    %13 = vector.load %arg7[%c0_13, %c0_14, %c0_15] : memref<1x64x6xf32, #tpu.memory_space<vmem>>, vector<1x64x6xf32>
    %14 = vector.shape_cast %13 : vector<1x64x6xf32> to vector<64x6xf32>
    %15 = vector.shape_cast %12 : vector<64x6xf32> to vector<1x64x6xf32>
    tpu.vector_store %arg7[%c0_13, %c0_14, %c0_15], %15 {strides = array<i32>} : memref<1x64x6xf32, #tpu.memory_space<vmem>>, vector<1x64x6xf32>,
    return
  }
  func.func @transform_0(%arg0: i32, %arg1: i32) -> (i32, i32, i32) {
    %c0_i32 = arith.constant 0 : i32
    %c0_i32_0 = arith.constant 0 : i32
    return %arg0, %arg1, %c0_i32 : i32, i32, i32
  }
  func.func @transform_1(%arg0: i32, %arg1: i32) -> (i32, i32, i32) {
    %c0_i32 = arith.constant 0 : i32
    %c0_i32_0 = arith.constant 0 : i32
    return %arg0, %arg1, %c0_i32 : i32, i32, i32
  }
  func.func @transform_2(%arg0: i32, %arg1: i32) -> (i32, i32) {
    %c0_i32 = arith.constant 0 : i32
    %c0_i32_0 = arith.constant 0 : i32
    %c0_i32_1 = arith.constant 0 : i32
    return %c0_i32, %c0_i32_0 : i32, i32
  }
  func.func @transform_3(%arg0: i32, %arg1: i32) -> (i32, i32, i32) {
    %c0_i32 = arith.constant 0 : i32
    %c0_i32_0 = arith.constant 0 : i32
    %c0_i32_1 = arith.constant 0 : i32
    return %arg0, %c0_i32, %c0_i32_0 : i32, i32, i32
  }
  func.func @transform_4(%arg0: i32, %arg1: i32) -> (i32, i32) {
    %c0_i32 = arith.constant 0 : i32
    %c0_i32_0 = arith.constant 0 : i32
    %c0_i32_1 = arith.constant 0 : i32
    return %c0_i32, %c0_i32_0 : i32, i32
  }
  func.func @transform_5(%arg0: i32, %arg1: i32) -> (i32, i32, i32) {
    %c0_i32 = arith.constant 0 : i32
    %c0_i32_0 = arith.constant 0 : i32
    return %arg0, %arg1, %c0_i32 : i32, i32, i32
  }
}

</mosaic_0001>

<llo_original>
// kernel: lraspp_forward.2
$region0: #{lraspp_forward.2}
  #allocation0 [shape = 'u32[]', space=smem, size = 0x4, offset = 0x4, fixed_abs, tag = 'smem constant byte address 0x4 - core index']
  #allocation1 [shape = 'u32[144,128]{1,0:T(1,128)}', space=vmem, size = 0x12000, scoped, tag = 'internal scratch']
  #allocation2 [shape = 'f32[1,16]{1,0:T(1,128)}', space=vmem, size = 0x200, scoped, tag = 'scratch operand']
  %s0 = inlined_call_operand.vmem [shape: bf16[2,16,16], index: 0, kind: input, shape index: {}]
  %s1 = inlined_call_operand.vmem [shape: bf16[16,128], index: 1, kind: input, shape index: {}]
  %s2 = inlined_call_operand.vmem [shape: f32[1,128], index: 2, kind: input, shape index: {}]
  %s3 = inlined_call_operand.vmem [shape: bf16[2,16,128], index: 3, kind: output, shape index: {0}]
  %s4 = inlined_call_operand.vmem [shape: f32[2,1,16], index: 4, kind: output, shape index: {1}]
  %5 = xla_tuple %s3, %s4
  %s6 = sld [smem:[#allocation0]]
  $region61: #{lraspp_forward.2} parent=0
    _
  %s8 = ssub.s32 1, %s6
  %s9 = scalar_select 0, %s8, %s6
  loop: start=0, step=1, limit=4
  $region2: #{lraspp_forward.2} parent=0 // loop_pre_header
    _
  $region3: #{lraspp_forward.2} parent=0 // loop_header
    %s11 = sphi 0, %s15
    %p12 = scmp.ge.s32.totalorder %s11, 4
    %s18 = sphi 0, %s30
    %s19 = sphi 0, %s26
    %s20 = sphi 0, %s18
    %s21 = sphi 0, %s19
    %s22 = sphi 0, %s20
    %s23 = sphi 0, %s21
    %s35 = sphi 0, %s37
    %s38 = sphi 0, %s35
    %s39 = sphi 0, %s38
    %s55 = sphi 0, %s39
    %s59 = sphi 0, %s59
    %s61 = sphi 0, %s59
    %s62 = sphi 0, %s61
    %s76 = sphi 0, %s62
    %s80 = sphi 0, %s80
    %s82 = sphi 0, %s80
    %s83 = sphi 0, %s82
    %s97 = sphi 0, %s83
    %s105 = sphi 0, %s107
    %s108 = sphi 0, %s105
    %s109 = sphi 0, %s108
    %s125 = sphi 0, %s109
    %s131 = sphi 0, %s133
    %s134 = sphi 0, %s131
    %s135 = sphi 0, %s134
    %s151 = sphi 0, %s135
  $region4: #{lraspp_forward.2} parent=0 // loop_header_branch
    %14 = sbr.rel (%p12) target = $region8
  $region5: #{lraspp_forward.2} parent=0 // loop_body
    %s16 = ssub.s32 %s11, 1
    %s17 = ssub.s32 %s11, 2
    %s24 = sadd.s32 1, %s19
    %p25 = scmp.ge.s32.totalorder %s24, 1
    %s26 = scalar_select %p25, 0, %s24
    %s27 = sadd.s32 1, %s18
    %s28 = scalar_select %p25, %s27, %s18
    %p29 = scmp.ge.s32.totalorder %s28, 2
    %s30 = scalar_select %p29, 0, %s28
    %s31 = ssub.s32 %s18, %s30
    %s32 = ssub.s32 %s19, %s26
    %s33 = sor.u32 %s31, %s32
    %p34 = scmp.eq.s32.totalorder %s33, 0
    %s36 = sadd.s32 %s35, 1
    %s37 = scalar_select %p34, %s35, %s36
    %p40 = pneg %p34
    %p41 = scmp.eq.s32.totalorder %s11, 1
    %p42 = por %p40, %p41
    %p43 = scmp.ne.s32.totalorder %s35, %s38
    %p44 = scmp.eq.s32.totalorder %s11, 0
    %p45 = por %p43, %p44
    %p46 = scmp.ne.s32.totalorder %s35, %s38
    %p47 = scmp.eq.s32.totalorder %s16, 1
    %p48 = por %p46, %p47
    %p49 = scmp.ne.s32.totalorder %s38, %s39
    %p50 = scmp.eq.s32.totalorder %s16, 0
    %p51 = por %p49, %p50
    %p52 = scmp.ne.s32.totalorder %s38, %s39
    %p53 = scmp.eq.s32.totalorder %s17, 1
    %p54 = por %p52, %p53
    %p56 = scmp.ne.s32.totalorder %s39, %s55
    %p57 = scmp.eq.s32.totalorder %s17, 0
    %p58 = por %p56, %p57
    %s60 = sadd.s32 %s59, 1
    %p63 = scmp.eq.s32.totalorder %s11, 1
    %p64 = scmp.ne.s32.totalorder %s59, %s61
    %p65 = scmp.eq.s32.totalorder %s11, 0
    %p66 = por %p64, %p65
    %p67 = scmp.ne.s32.totalorder %s59, %s61
    %p68 = scmp.eq.s32.totalorder %s16, 1
    %p69 = por %p67, %p68
    %p70 = scmp.ne.s32.totalorder %s61, %s62
    %p71 = scmp.eq.s32.totalorder %s16, 0
    %p72 = por %p70, %p71
    %p73 = scmp.ne.s32.totalorder %s61, %s62
    %p74 = scmp.eq.s32.totalorder %s17, 1
    %p75 = por %p73, %p74
    %p77 = scmp.ne.s32.totalorder %s62, %s76
    %p78 = scmp.eq.s32.totalorder %s17, 0
    %p79 = por %p77, %p78
    %s81 = sadd.s32 %s80, 1
    %p84 = scmp.eq.s32.totalorder %s11, 1
    %p85 = scmp.ne.s32.totalorder %s80, %s82
    %p86 = scmp.eq.s32.totalorder %s11, 0
    %p87 = por %p85, %p86
    %p88 = scmp.ne.s32.totalorder %s80, %s82
    %p89 = scmp.eq.s32.totalorder %s16, 1
    %p90 = por %p88, %p89
    %p91 = scmp.ne.s32.totalorder %s82, %s83
    %p92 = scmp.eq.s32.totalorder %s16, 0
    %p93 = por %p91, %p92
    %p94 = scmp.ne.s32.totalorder %s82, %s83
    %p95 = scmp.eq.s32.totalorder %s17, 1
    %p96 = por %p94, %p95
    %p98 = scmp.ne.s32.totalorder %s83, %s97
    %p99 = scmp.eq.s32.totalorder %s17, 0
    %p100 = por %p98, %p99
    %s101 = ssub.s32 %s18, %s30
    %s102 = ssub.s32 %s19, %s26
    %s103 = sor.u32 %s101, %s102
    %p104 = scmp.eq.s32.totalorder %s103, 0
    %s106 = sadd.s32 %s105, 1
    %s107 = scalar_select %p104, %s105, %s106
    %p110 = pneg %p104
    %p111 = scmp.eq.s32.totalorder %s11, 1
    %p112 = por %p110, %p111
    %p113 = scmp.ne.s32.totalorder %s105, %s108
    %p114 = scmp.eq.s32.totalorder %s11, 0
    %p115 = por %p113, %p114
    %p116 = scmp.ne.s32.totalorder %s105, %s108
    %p117 = scmp.eq.s32.totalorder %s16, 1
    %p118 = por %p116, %p117
    %p119 = scmp.ne.s32.totalorder %s108, %s109
    %p120 = scmp.eq.s32.totalorder %s16, 0
    %p121 = por %p119, %p120
    %p122 = scmp.ne.s32.totalorder %s108, %s109
    %p123 = scmp.eq.s32.totalorder %s17, 1
    %p124 = por %p122, %p123
    %p126 = scmp.ne.s32.totalorder %s109, %s125
    %p127 = scmp.eq.s32.totalorder %s17, 0
    %p128 = por %p126, %p127
    %s129 = ssub.s32 %s18, %s30
    %p130 = scmp.eq.s32.totalorder %s129, 0
    %s132 = sadd.s32 %s131, 1
    %s133 = scalar_select %p130, %s131, %s132
    %p136 = pneg %p130
    %p137 = scmp.eq.s32.totalorder %s11, 1
    %p138 = por %p136, %p137
    %p139 = scmp.ne.s32.totalorder %s131, %s134
    %p140 = scmp.eq.s32.totalorder %s11, 0
    %p141 = por %p139, %p140
    %p142 = scmp.ne.s32.totalorder %s131, %s134
    %p143 = scmp.eq.s32.totalorder %s16, 1
    %p144 = por %p142, %p143
    %p145 = scmp.ne.s32.totalorder %s134, %s135
    %p146 = scmp.eq.s32.totalorder %s16, 0
    %p147 = por %p145, %p146
    %p148 = scmp.ne.s32.totalorder %s134, %s135
    %p149 = scmp.eq.s32.totalorder %s17, 1
    %p150 = por %p148, %p149
    %p152 = scmp.ne.s32.totalorder %s135, %s151
    %p153 = scmp.eq.s32.totalorder %s17, 0
    %p154 = por %p152, %p153
    %p155 = scmp.le.s32.totalorder 1, %s11
    %p156 = scmp.lt.s32.totalorder %s11, 3
    %p157 = pnand %p155, %p156
    %p158 = pneg %p157
    // Predicated region
    $region9: #{lraspp_forward.2} parent=5 // pred_check
      _
    $region10: #{lraspp_forward.2} parent=5 // pred_check_branch
      %160 = sbr.rel (%p157) target = $region12
    $region11: #{lraspp_forward.2} parent=5 // pred_region
      %s161 = ssub.s32 %s11, 1
      // Predicated region
      $region13: #{lraspp_forward.2} parent=11 // pred_check
        %p162 = pneg %p72
      $region14: #{lraspp_forward.2} parent=11 // pred_check_branch
        %164 = sbr.rel (%p162) target = $region16
      $region15: #{lraspp_forward.2} parent=11 // pred_region
        _
      $region16: #{lraspp_forward.2} parent=11 // pred_fallthru
        _
      // Predicated region
      $region17: #{lraspp_forward.2} parent=11 // pred_check
        %p165 = pneg %p93
      $region18: #{lraspp_forward.2} parent=11 // pred_check_branch
        %167 = sbr.rel (%p165) target = $region20
      $region19: #{lraspp_forward.2} parent=11 // pred_region
        _
      $region20: #{lraspp_forward.2} parent=11 // pred_fallthru
        _
    $region12: #{lraspp_forward.2} parent=5 // pred_fallthru
      _
    %p168 = scmp.lt.s32.totalorder %s11, 2
    // Predicated region
    $region21: #{lraspp_forward.2} parent=5 // pred_check
      %p169 = pneg %p168
    $region22: #{lraspp_forward.2} parent=5 // pred_check_branch
      %171 = sbr.rel (%p169) target = $region24
    $region23: #{lraspp_forward.2} parent=5 // pred_region
      // Predicated region
      $region25: #{lraspp_forward.2} parent=23 // pred_check
        %p172 = pneg %p45
      $region26: #{lraspp_forward.2} parent=23 // pred_check_branch
        %174 = sbr.rel (%p172) target = $region28
      $region27: #{lraspp_forward.2} parent=23 // pred_region
        %s175 = smul.u32 2, %s19
        %p176 = scmp.lt.s32.totalorder %s18, 1
        %s177 = scalar_select %p176, %s18, 1
        %p178 = scmp.lt.s32.totalorder %s175, 1
        %s179 = scalar_select %p178, %s175, 1
        %s180 = smul.addr %s177, 2
        %s181 = sadd.s32 %s179, %s180
        %s182 = smul.addr %s181, 4
        %s183 = scalar_lea.vmem %s0, %s182
        %s184 = smul.u32 2, %s19
      $region28: #{lraspp_forward.2} parent=23 // pred_fallthru
        _
    $region24: #{lraspp_forward.2} parent=5 // pred_fallthru
      _
    %p185 = scmp.le.s32.totalorder 1, %s11
    %p186 = scmp.lt.s32.totalorder %s11, 3
    %p187 = pnand %p185, %p186
    %p188 = pneg %p187
    // Predicated region
    $region29: #{lraspp_forward.2} parent=5 // pred_check
      _
    $region30: #{lraspp_forward.2} parent=5 // pred_check_branch
      %190 = sbr.rel (%p187) target = $region32
    $region31: #{lraspp_forward.2} parent=5 // pred_region
      %s191 = ssub.s32 %s11, 1
      %s192 = smul.u32 2, %s21
      %p193 = scmp.lt.s32.totalorder %s20, 1
      %s194 = scalar_select %p193, %s20, 1
      %p195 = scmp.lt.s32.totalorder %s192, 1
      %s196 = scalar_select %p195, %s192, 1
      %s197 = smul.addr %s194, 2
      %s198 = sadd.s32 %s196, %s197
      %s199 = smul.addr %s198, 4
      %s200 = scalar_lea.vmem %s0, %s199
      %p201 = pneg %p51
      %p202 = pneg %p48
      %p203 = pneg %p72
      %p204 = pneg %p69
      %p205 = pneg %p93
      %p206 = pneg %p90
      %p207 = pneg %p121
      %p208 = pneg %p118
      %s209 = smul.u32 2, %s21
      %p210 = scmp.lt.s32.totalorder %s20, 1
      %s211 = scalar_select %p210, %s20, 1
      %p212 = scmp.lt.s32.totalorder %s209, 1
      %s213 = scalar_select %p212, %s209, 1
      %s214 = smul.addr %s211, 2
      %s215 = sadd.s32 %s213, %s214
      %s216 = smul.addr %s215, 4
      %s217 = scalar_lea.vmem %s3, %s216
      %p218 = pneg %p147
      %p219 = pneg %p144
      %p220 = scmp.lt.s32.totalorder %s20, 1
      %s221 = scalar_select %p220, %s20, 1
      %s222 = scalar_lea.vmem %s4, %s221
      %s223 = smul.u32 2, %s21
      %p224 = scmp.lt.s32.totalorder %s20, 1
      %s225 = scalar_select %p224, %s20, 1
      %p226 = scmp.lt.s32.totalorder %s223, 1
      %s227 = scalar_select %p226, %s223, 1
      %s228 = smul.addr %s225, 2
      %s229 = sadd.s32 %s227, %s228
      %s230 = smul.addr %s229, 4
      %s231 = scalar_lea.vmem %s0, %s230
      %s232 = smul.u32 2, %s21
      %s233 = smul.u32 2, %s21
      %p234 = scmp.lt.s32.totalorder %s20, 1
      %s235 = scalar_select %p234, %s20, 1
      %p236 = scmp.lt.s32.totalorder %s233, 1
      %s237 = scalar_select %p236, %s233, 1
      %s238 = smul.addr %s235, 2
      %s239 = sadd.s32 %s237, %s238
      %s240 = smul.addr %s239, 4
      %s241 = scalar_lea.vmem %s3, %s240
      %s242 = smul.u32 2, %s21
      %p243 = scmp.lt.s32.totalorder %s20, 1
      %s244 = scalar_select %p243, %s20, 1
      %s245 = scalar_lea.vmem %s4, %s244
      %p247 = scmp.eq.s32.totalorder %s21, 0
      // Predicated region
      $region33: #{lraspp_forward.2} parent=31 // pred_check
        %p248 = pneg %p247
      $region34: #{lraspp_forward.2} parent=31 // pred_check_branch
        %250 = sbr.rel (%p248) target = $region36
      $region35: #{lraspp_forward.2} parent=31 // pred_region
        %vm251 = vcmask 122880
        %252 = vst.msk [vmem:[#allocation2] sm:$0x1] %vm251, 0.0
      $region36: #{lraspp_forward.2} parent=31 // pred_fallthru
        _
      %v253 = vld [vmem:[%s231] sm:$0xf]
      %v254 = vld [vmem:[%s231 + $0x4] sm:$0xf]
      %v255 = vld [vmem:[#allocation2] sm:$0x1]
      %v256 = vunpack.c.l.bf16 %v253
      %v257 = vunpack.c.l.bf16 %v254
      %vm258 = vcmask 130048
      %v259 = vsel %vm258, %v256, 0.0
      %v260 = vsel %vm258, %v257, 0.0
      %v261 = vadd.f32 %v259, %v260
      %v262 = vrot.slane %v261, 4
      %v263 = vadd.f32 %v261, %v262
      %v264 = vrot.slane %v263, 2
      %v265 = vadd.f32 %v263, %v264
      %v266 = vrot.slane %v265, 1
      %v267 = vadd.f32 %v265, %v266
      %v268 = vadd.f32 %v255, %v267
      %vm269 = vcmask 122880
      %270 = vst.msk [vmem:[#allocation2] sm:$0x1] %vm269, %v268
      %v271 = vld [vmem:[%s1] sm:$0xf]
      %v272 = vld [vmem:[%s1 + $0x4] sm:$0xf]
      %v273 = vld [vmem:[%s2] sm:$0x1]
      %v275 = vlaneseq
      %v276 = vshrl.u32 %v275, 7
      %v277 = vsub.s32 0, %v276
      %v278 = vrot.slane %v273, %v277
      %v282 = vunpack.c.l.b16 %v253
      %v283 = vunpack.c.l.b16 %v254
      %v284 = vpack.c.b16 %v283, %v282
      %v287 = vunpack.c.l.b16 %v271
      %v288 = vunpack.c.l.b16 %v272
      %v289 = vpack.c.b16 %v288, %v287
      %v292 = vsel %vm258, %v284, 0
      %294 = vmatprep.subr.bf16.mxu0 0
      %295 = vmatpush1.bf16.msra.mxu0 %v289
      %296 = vmatprep.subr.bf16.mxu0 0
      %297 = vmatpush1.bf16.msra.mxu0 0
      %298 = vmatprep.subr.bf16.mxu0 0
      %299 = vmatpush1.bf16.msra.mxu0 0
      %300 = vmatprep.subr.bf16.mxu0 0
      %301 = vmatpush1.bf16.msra.mxu0 0
      %302 = vmatprep.subr.bf16.mxu0 0
      %303 = vmatpush1.bf16.msra.mxu0 0
      %304 = vmatprep.subr.bf16.mxu0 0
      %305 = vmatpush1.bf16.msra.mxu0 0
      %306 = vmatprep.subr.bf16.mxu0 0
      %307 = vmatpush1.bf16.msra.mxu0 0
      %308 = vmatprep.subr.bf16.mxu0 0
      %309 = vmatpush1.bf16.msra.mxu0 0
      %310 = vmatprep.subr.bf16.mxu0 0
      %311 = vmatpush1.bf16.msra.mxu0 0
      %312 = vmatprep.subr.bf16.mxu0 0
      %313 = vmatpush1.bf16.msra.mxu0 0
      %314 = vmatprep.subr.bf16.mxu0 0
      %315 = vmatpush1.bf16.msra.mxu0 0
      %316 = vmatprep.subr.bf16.mxu0 0
      %317 = vmatpush1.bf16.msra.mxu0 0
      %318 = vmatprep.subr.bf16.mxu0 0
      %319 = vmatpush1.bf16.msra.mxu0 0
      %320 = vmatprep.subr.bf16.mxu0 0
      %321 = vmatpush1.bf16.msra.mxu0 0
      %322 = vmatprep.subr.bf16.mxu0 0
      %323 = vmatpush1.bf16.msra.mxu0 0
      %324 = vmatprep.subr.bf16.mxu0 0
      %325 = vmatpush1.bf16.msra.mxu0 0
      %326 = vmatprep.mubr.bf16.mxu0 0
      %327 = vmatmul.mubr.bf16.gmra.mrb[0].mxu0 %v292
      %v328 = vpop.f32.mrb[0].mxu0
      %v329 = vadd.f32 %v278, %v328
      %v330 = vpop.f32.mrb[0].mxu0
      %v331 = vpop.f32.mrb[0].mxu0
      %v332 = vadd.f32 %v278, %v331
      %v333 = vpop.f32.mrb[0].mxu0
      %334 = vdwg.mxu0
      %v335 = vmax.f32 %v329, 0.0
      %v336 = vmax.f32 %v332, 0.0
      %v337 = vpack.c.bf16 %v336, %v335
      %v339 = vunpack.c.l.b16 %v337
      %v340 = vunpack.c.h.b16 %v337
      %v341 = vpack.c.b16 %v339, %v339
      %v342 = vpack.c.b16 %v340, %v340
      %345 = vst [vmem:[%s241] sm:$0xf] %v341
      %346 = vst [vmem:[%s241 + $0x4] sm:$0xf] %v342
      // Predicated region
      $region37: #{lraspp_forward.2} parent=31 // pred_check
        %p347 = pneg %p247
      $region38: #{lraspp_forward.2} parent=31 // pred_check_branch
        %349 = sbr.rel (%p347) target = $region40
      $region39: #{lraspp_forward.2} parent=31 // pred_region
        %v350 = vld [vmem:[#allocation2] sm:$0x1]
        %351 = vst.msk [vmem:[%s245] sm:$0x1] %vm269, %v350
      $region40: #{lraspp_forward.2} parent=31 // pred_fallthru
        _
      %s352 = smul.u32 2, %s21
      %p353 = scmp.lt.s32.totalorder %s20, 1
      %s354 = scalar_select %p353, %s20, 1
      %p355 = scmp.lt.s32.totalorder %s352, 1
      %s356 = scalar_select %p355, %s352, 1
      %s357 = smul.addr %s354, 2
      %s358 = sadd.s32 %s356, %s357
      %s359 = smul.addr %s358, 4
      %s360 = scalar_lea.vmem %s3, %s359
      %p361 = scmp.lt.s32.totalorder %s20, 1
      %s362 = scalar_select %p361, %s20, 1
      %s363 = scalar_lea.vmem %s4, %s362
      // Predicated region
      $region41: #{lraspp_forward.2} parent=31 // pred_check
        %p364 = pneg %p118
      $region42: #{lraspp_forward.2} parent=31 // pred_check_branch
        %366 = sbr.rel (%p364) target = $region44
      $region43: #{lraspp_forward.2} parent=31 // pred_region
        %s367 = smul.u32 2, %s21
      $region44: #{lraspp_forward.2} parent=31 // pred_fallthru
        _
      // Predicated region
      $region45: #{lraspp_forward.2} parent=31 // pred_check
        %p368 = pneg %p144
      $region46: #{lraspp_forward.2} parent=31 // pred_check_branch
        %370 = sbr.rel (%p368) target = $region48
      $region47: #{lraspp_forward.2} parent=31 // pred_region
        _
      $region48: #{lraspp_forward.2} parent=31 // pred_fallthru
        _
    $region32: #{lraspp_forward.2} parent=5 // pred_fallthru
      _
    %p371 = scmp.le.s32.totalorder 2, %s11
    // Predicated region
    $region49: #{lraspp_forward.2} parent=5 // pred_check
      %p372 = pneg %p371
    $region50: #{lraspp_forward.2} parent=5 // pred_check_branch
      %374 = sbr.rel (%p372) target = $region52
    $region51: #{lraspp_forward.2} parent=5 // pred_region
      %s375 = ssub.s32 %s11, 2
      // Predicated region
      $region53: #{lraspp_forward.2} parent=51 // pred_check
        %p376 = pneg %p124
      $region54: #{lraspp_forward.2} parent=51 // pred_check_branch
        %378 = sbr.rel (%p376) target = $region56
      $region55: #{lraspp_forward.2} parent=51 // pred_region
        %s379 = smul.u32 2, %s23
        %p380 = scmp.lt.s32.totalorder %s22, 1
        %s381 = scalar_select %p380, %s22, 1
        %p382 = scmp.lt.s32.totalorder %s379, 1
        %s383 = scalar_select %p382, %s379, 1
        %s384 = smul.addr %s381, 2
        %s385 = sadd.s32 %s383, %s384
        %s386 = smul.addr %s385, 4
        %s387 = scalar_lea.vmem %s3, %s386
      $region56: #{lraspp_forward.2} parent=51 // pred_fallthru
        _
      // Predicated region
      $region57: #{lraspp_forward.2} parent=51 // pred_check
        %p388 = pneg %p150
      $region58: #{lraspp_forward.2} parent=51 // pred_check_branch
        %390 = sbr.rel (%p388) target = $region60
      $region59: #{lraspp_forward.2} parent=51 // pred_region
        %p391 = scmp.lt.s32.totalorder %s22, 1
        %s392 = scalar_select %p391, %s22, 1
        %s393 = scalar_lea.vmem %s4, %s392
      $region60: #{lraspp_forward.2} parent=51 // pred_fallthru
        _
    $region52: #{lraspp_forward.2} parent=5 // pred_fallthru
      _
  $region6: #{lraspp_forward.2} parent=0 // loop_footer
    %s15 = sadd.s32 1, %s11
  $region7: #{lraspp_forward.2} parent=0 // loop_footer_branch
    %10 = sbr.rel target = $region3
  $region8: #{lraspp_forward.2} parent=0 // loop_exit
    _

// kernel: lraspp_forward.3
$region0: #{lraspp_forward.3}
  #allocation0 [shape = 'u32[]', space=smem, size = 0x4, offset = 0x4, fixed_abs, tag = 'smem constant byte address 0x4 - core index']
  #allocation1 [shape = 'u32[144,128]{1,0:T(1,128)}', space=vmem, size = 0x12000, scoped, tag = 'internal scratch']
  %s0 = inlined_call_operand.vmem [shape: bf16[2,64,8], index: 0, kind: input, shape index: {}]
  %s1 = inlined_call_operand.vmem [shape: bf16[2,64,128], index: 1, kind: input, shape index: {}]
  %s2 = inlined_call_operand.vmem [shape: bf16[8,6], index: 2, kind: input, shape index: {}]
  %s3 = inlined_call_operand.vmem [shape: bf16[2,128,6], index: 3, kind: input, shape index: {}]
  %s4 = inlined_call_operand.vmem [shape: f32[1,6], index: 4, kind: input, shape index: {}]
  %s5 = inlined_call_operand.vmem [shape: f32[2,64,6], index: 5, kind: output, shape index: {}]
  %s6 = sld [smem:[#allocation0]]
  $region53: #{lraspp_forward.3} parent=0
    _
  %s8 = ssub.s32 1, %s6
  %s9 = scalar_select 0, %s8, %s6
  loop: start=0, step=1, limit=4
  $region2: #{lraspp_forward.3} parent=0 // loop_pre_header
    _
  $region3: #{lraspp_forward.3} parent=0 // loop_header
    %s11 = sphi 0, %s15
    %p12 = scmp.ge.s32.totalorder %s11, 4
    %s18 = sphi 0, %s30
    %s19 = sphi 0, %s26
    %s20 = sphi 0, %s18
    %s21 = sphi 0, %s19
    %s22 = sphi 0, %s20
    %s23 = sphi 0, %s21
    %s35 = sphi 0, %s37
    %s38 = sphi 0, %s35
    %s39 = sphi 0, %s38
    %s55 = sphi 0, %s39
    %s63 = sphi 0, %s65
    %s66 = sphi 0, %s63
    %s67 = sphi 0, %s66
    %s83 = sphi 0, %s67
    %s87 = sphi 0, %s87
    %s89 = sphi 0, %s87
    %s90 = sphi 0, %s89
    %s104 = sphi 0, %s90
    %s110 = sphi 0, %s112
    %s113 = sphi 0, %s110
    %s114 = sphi 0, %s113
    %s130 = sphi 0, %s114
    %s134 = sphi 0, %s134
    %s136 = sphi 0, %s134
    %s137 = sphi 0, %s136
    %s151 = sphi 0, %s137
    %s159 = sphi 0, %s161
    %s162 = sphi 0, %s159
    %s163 = sphi 0, %s162
    %s179 = sphi 0, %s163
  $region4: #{lraspp_forward.3} parent=0 // loop_header_branch
    %14 = sbr.rel (%p12) target = $region8
  $region5: #{lraspp_forward.3} parent=0 // loop_body
    %s16 = ssub.s32 %s11, 1
    %s17 = ssub.s32 %s11, 2
    %s24 = sadd.s32 1, %s19
    %p25 = scmp.ge.s32.totalorder %s24, 1
    %s26 = scalar_select %p25, 0, %s24
    %s27 = sadd.s32 1, %s18
    %s28 = scalar_select %p25, %s27, %s18
    %p29 = scmp.ge.s32.totalorder %s28, 2
    %s30 = scalar_select %p29, 0, %s28
    %s31 = ssub.s32 %s18, %s30
    %s32 = ssub.s32 %s19, %s26
    %s33 = sor.u32 %s31, %s32
    %p34 = scmp.eq.s32.totalorder %s33, 0
    %s36 = sadd.s32 %s35, 1
    %s37 = scalar_select %p34, %s35, %s36
    %p40 = pneg %p34
    %p41 = scmp.eq.s32.totalorder %s11, 1
    %p42 = por %p40, %p41
    %p43 = scmp.ne.s32.totalorder %s35, %s38
    %p44 = scmp.eq.s32.totalorder %s11, 0
    %p45 = por %p43, %p44
    %p46 = scmp.ne.s32.totalorder %s35, %s38
    %p47 = scmp.eq.s32.totalorder %s16, 1
    %p48 = por %p46, %p47
    %p49 = scmp.ne.s32.totalorder %s38, %s39
    %p50 = scmp.eq.s32.totalorder %s16, 0
    %p51 = por %p49, %p50
    %p52 = scmp.ne.s32.totalorder %s38, %s39
    %p53 = scmp.eq.s32.totalorder %s17, 1
    %p54 = por %p52, %p53
    %p56 = scmp.ne.s32.totalorder %s39, %s55
    %p57 = scmp.eq.s32.totalorder %s17, 0
    %p58 = por %p56, %p57
    %s59 = ssub.s32 %s18, %s30
    %s60 = ssub.s32 %s19, %s26
    %s61 = sor.u32 %s59, %s60
    %p62 = scmp.eq.s32.totalorder %s61, 0
    %s64 = sadd.s32 %s63, 1
    %s65 = scalar_select %p62, %s63, %s64
    %p68 = pneg %p62
    %p69 = scmp.eq.s32.totalorder %s11, 1
    %p70 = por %p68, %p69
    %p71 = scmp.ne.s32.totalorder %s63, %s66
    %p72 = scmp.eq.s32.totalorder %s11, 0
    %p73 = por %p71, %p72
    %p74 = scmp.ne.s32.totalorder %s63, %s66
    %p75 = scmp.eq.s32.totalorder %s16, 1
    %p76 = por %p74, %p75
    %p77 = scmp.ne.s32.totalorder %s66, %s67
    %p78 = scmp.eq.s32.totalorder %s16, 0
    %p79 = por %p77, %p78
    %p80 = scmp.ne.s32.totalorder %s66, %s67
    %p81 = scmp.eq.s32.totalorder %s17, 1
    %p82 = por %p80, %p81
    %p84 = scmp.ne.s32.totalorder %s67, %s83
    %p85 = scmp.eq.s32.totalorder %s17, 0
    %p86 = por %p84, %p85
    %s88 = sadd.s32 %s87, 1
    %p91 = scmp.eq.s32.totalorder %s11, 1
    %p92 = scmp.ne.s32.totalorder %s87, %s89
    %p93 = scmp.eq.s32.totalorder %s11, 0
    %p94 = por %p92, %p93
    %p95 = scmp.ne.s32.totalorder %s87, %s89
    %p96 = scmp.eq.s32.totalorder %s16, 1
    %p97 = por %p95, %p96
    %p98 = scmp.ne.s32.totalorder %s89, %s90
    %p99 = scmp.eq.s32.totalorder %s16, 0
    %p100 = por %p98, %p99
    %p101 = scmp.ne.s32.totalorder %s89, %s90
    %p102 = scmp.eq.s32.totalorder %s17, 1
    %p103 = por %p101, %p102
    %p105 = scmp.ne.s32.totalorder %s90, %s104
    %p106 = scmp.eq.s32.totalorder %s17, 0
    %p107 = por %p105, %p106
    %s108 = ssub.s32 %s18, %s30
    %p109 = scmp.eq.s32.totalorder %s108, 0
    %s111 = sadd.s32 %s110, 1
    %s112 = scalar_select %p109, %s110, %s111
    %p115 = pneg %p109
    %p116 = scmp.eq.s32.totalorder %s11, 1
    %p117 = por %p115, %p116
    %p118 = scmp.ne.s32.totalorder %s110, %s113
    %p119 = scmp.eq.s32.totalorder %s11, 0
    %p120 = por %p118, %p119
    %p121 = scmp.ne.s32.totalorder %s110, %s113
    %p122 = scmp.eq.s32.totalorder %s16, 1
    %p123 = por %p121, %p122
    %p124 = scmp.ne.s32.totalorder %s113, %s114
    %p125 = scmp.eq.s32.totalorder %s16, 0
    %p126 = por %p124, %p125
    %p127 = scmp.ne.s32.totalorder %s113, %s114
    %p128 = scmp.eq.s32.totalorder %s17, 1
    %p129 = por %p127, %p128
    %p131 = scmp.ne.s32.totalorder %s114, %s130
    %p132 = scmp.eq.s32.totalorder %s17, 0
    %p133 = por %p131, %p132
    %s135 = sadd.s32 %s134, 1
    %p138 = scmp.eq.s32.totalorder %s11, 1
    %p139 = scmp.ne.s32.totalorder %s134, %s136
    %p140 = scmp.eq.s32.totalorder %s11, 0
    %p141 = por %p139, %p140
    %p142 = scmp.ne.s32.totalorder %s134, %s136
    %p143 = scmp.eq.s32.totalorder %s16, 1
    %p144 = por %p142, %p143
    %p145 = scmp.ne.s32.totalorder %s136, %s137
    %p146 = scmp.eq.s32.totalorder %s16, 0
    %p147 = por %p145, %p146
    %p148 = scmp.ne.s32.totalorder %s136, %s137
    %p149 = scmp.eq.s32.totalorder %s17, 1
    %p150 = por %p148, %p149
    %p152 = scmp.ne.s32.totalorder %s137, %s151
    %p153 = scmp.eq.s32.totalorder %s17, 0
    %p154 = por %p152, %p153
    %s155 = ssub.s32 %s18, %s30
    %s156 = ssub.s32 %s19, %s26
    %s157 = sor.u32 %s155, %s156
    %p158 = scmp.eq.s32.totalorder %s157, 0
    %s160 = sadd.s32 %s159, 1
    %s161 = scalar_select %p158, %s159, %s160
    %p164 = pneg %p158
    %p165 = scmp.eq.s32.totalorder %s11, 1
    %p166 = por %p164, %p165
    %p167 = scmp.ne.s32.totalorder %s159, %s162
    %p168 = scmp.eq.s32.totalorder %s11, 0
    %p169 = por %p167, %p168
    %p170 = scmp.ne.s32.totalorder %s159, %s162
    %p171 = scmp.eq.s32.totalorder %s16, 1
    %p172 = por %p170, %p171
    %p173 = scmp.ne.s32.totalorder %s162, %s163
    %p174 = scmp.eq.s32.totalorder %s16, 0
    %p175 = por %p173, %p174
    %p176 = scmp.ne.s32.totalorder %s162, %s163
    %p177 = scmp.eq.s32.totalorder %s17, 1
    %p178 = por %p176, %p177
    %p180 = scmp.ne.s32.totalorder %s163, %s179
    %p181 = scmp.eq.s32.totalorder %s17, 0
    %p182 = por %p180, %p181
    %p183 = scmp.le.s32.totalorder 1, %s11
    %p184 = scmp.lt.s32.totalorder %s11, 3
    %p185 = pnand %p183, %p184
    %p186 = pneg %p185
    // Predicated region
    $region9: #{lraspp_forward.3} parent=5 // pred_check
      _
    $region10: #{lraspp_forward.3} parent=5 // pred_check_branch
      %188 = sbr.rel (%p185) target = $region12
    $region11: #{lraspp_forward.3} parent=5 // pred_region
      %s189 = ssub.s32 %s11, 1
      // Predicated region
      $region13: #{lraspp_forward.3} parent=11 // pred_check
        %p190 = pneg %p100
      $region14: #{lraspp_forward.3} parent=11 // pred_check_branch
        %192 = sbr.rel (%p190) target = $region16
      $region15: #{lraspp_forward.3} parent=11 // pred_region
        _
      $region16: #{lraspp_forward.3} parent=11 // pred_fallthru
        _
      // Predicated region
      $region17: #{lraspp_forward.3} parent=11 // pred_check
        %p193 = pneg %p147
      $region18: #{lraspp_forward.3} parent=11 // pred_check_branch
        %195 = sbr.rel (%p193) target = $region20
      $region19: #{lraspp_forward.3} parent=11 // pred_region
        _
      $region20: #{lraspp_forward.3} parent=11 // pred_fallthru
        _
    $region12: #{lraspp_forward.3} parent=5 // pred_fallthru
      _
    %p196 = scmp.lt.s32.totalorder %s11, 2
    // Predicated region
    $region21: #{lraspp_forward.3} parent=5 // pred_check
      %p197 = pneg %p196
    $region22: #{lraspp_forward.3} parent=5 // pred_check_branch
      %199 = sbr.rel (%p197) target = $region24
    $region23: #{lraspp_forward.3} parent=5 // pred_region
      // Predicated region
      $region25: #{lraspp_forward.3} parent=23 // pred_check
        %p200 = pneg %p45
      $region26: #{lraspp_forward.3} parent=23 // pred_check_branch
        %202 = sbr.rel (%p200) target = $region28
      $region27: #{lraspp_forward.3} parent=23 // pred_region
        %s203 = smul.u32 8, %s19
        %p204 = scmp.lt.s32.totalorder %s18, 1
        %s205 = scalar_select %p204, %s18, 1
        %p206 = scmp.lt.s32.totalorder %s203, 7
        %s207 = scalar_select %p206, %s203, 7
        %s208 = smul.addr %s205, 8
        %s209 = sadd.s32 %s207, %s208
        %s210 = smul.addr %s209, 4
        %s211 = scalar_lea.vmem %s0, %s210
        %s212 = smul.u32 8, %s19
      $region28: #{lraspp_forward.3} parent=23 // pred_fallthru
        _
      // Predicated region
      $region29: #{lraspp_forward.3} parent=23 // pred_check
        %p213 = pneg %p73
      $region30: #{lraspp_forward.3} parent=23 // pred_check_branch
        %215 = sbr.rel (%p213) target = $region32
      $region31: #{lraspp_forward.3} parent=23 // pred_region
        %s216 = smul.u32 8, %s19
        %p217 = scmp.lt.s32.totalorder %s18, 1
        %s218 = scalar_select %p217, %s18, 1
        %p219 = scmp.lt.s32.totalorder %s216, 7
        %s220 = scalar_select %p219, %s216, 7
        %s221 = smul.addr %s218, 8
        %s222 = sadd.s32 %s220, %s221
        %s223 = smul.addr %s222, 4
        %s224 = scalar_lea.vmem %s1, %s223
        %s225 = smul.u32 8, %s19
      $region32: #{lraspp_forward.3} parent=23 // pred_fallthru
        _
      // Predicated region
      $region33: #{lraspp_forward.3} parent=23 // pred_check
        %p226 = pneg %p120
      $region34: #{lraspp_forward.3} parent=23 // pred_check_branch
        %228 = sbr.rel (%p226) target = $region36
      $region35: #{lraspp_forward.3} parent=23 // pred_region
        %p229 = scmp.lt.s32.totalorder %s18, 1
        %s230 = scalar_select %p229, %s18, 1
        %s231 = smul.addr %s230, 16
        %s232 = smul.addr %s231, 4
        %s233 = scalar_lea.vmem %s3, %s232
      $region36: #{lraspp_forward.3} parent=23 // pred_fallthru
        _
    $region24: #{lraspp_forward.3} parent=5 // pred_fallthru
      _
    %p234 = scmp.le.s32.totalorder 1, %s11
    %p235 = scmp.lt.s32.totalorder %s11, 3
    %p236 = pnand %p234, %p235
    %p237 = pneg %p236
    // Predicated region
    $region37: #{lraspp_forward.3} parent=5 // pred_check
      _
    $region38: #{lraspp_forward.3} parent=5 // pred_check_branch
      %239 = sbr.rel (%p236) target = $region40
    $region39: #{lraspp_forward.3} parent=5 // pred_region
      %s240 = ssub.s32 %s11, 1
      %s241 = smul.u32 8, %s21
      %p242 = scmp.lt.s32.totalorder %s20, 1
      %s243 = scalar_select %p242, %s20, 1
      %p244 = scmp.lt.s32.totalorder %s241, 7
      %s245 = scalar_select %p244, %s241, 7
      %s246 = smul.addr %s243, 8
      %s247 = sadd.s32 %s245, %s246
      %s248 = smul.addr %s247, 4
      %s249 = scalar_lea.vmem %s0, %s248
      %p250 = pneg %p51
      %p251 = pneg %p48
      %s252 = smul.u32 8, %s21
      %p253 = scmp.lt.s32.totalorder %s20, 1
      %s254 = scalar_select %p253, %s20, 1
      %p255 = scmp.lt.s32.totalorder %s252, 7
      %s256 = scalar_select %p255, %s252, 7
      %s257 = smul.addr %s254, 8
      %s258 = sadd.s32 %s256, %s257
      %s259 = smul.addr %s258, 4
      %s260 = scalar_lea.vmem %s1, %s259
      %p261 = pneg %p79
      %p262 = pneg %p76
      %p263 = pneg %p100
      %p264 = pneg %p97
      %p265 = scmp.lt.s32.totalorder %s20, 1
      %s266 = scalar_select %p265, %s20, 1
      %s267 = smul.addr %s266, 16
      %s268 = smul.addr %s267, 4
      %s269 = scalar_lea.vmem %s3, %s268
      %p270 = pneg %p126
      %p271 = pneg %p123
      %p272 = pneg %p147
      %p273 = pneg %p144
      %p274 = pneg %p175
      %p275 = pneg %p172
      %s276 = smul.u32 8, %s21
      %p277 = scmp.lt.s32.totalorder %s20, 1
      %s278 = scalar_select %p277, %s20, 1
      %p279 = scmp.lt.s32.totalorder %s276, 7
      %s280 = scalar_select %p279, %s276, 7
      %s281 = smul.addr %s278, 8
      %s282 = sadd.s32 %s280, %s281
      %s283 = smul.addr %s282, 8
      %s284 = scalar_lea.vmem %s5, %s283
      %s285 = smul.u32 8, %s21
      %p286 = scmp.lt.s32.totalorder %s20, 1
      %s287 = scalar_select %p286, %s20, 1
      %p288 = scmp.lt.s32.totalorder %s285, 7
      %s289 = scalar_select %p288, %s285, 7
      %s290 = smul.addr %s287, 8
      %s291 = sadd.s32 %s289, %s290
      %s292 = smul.addr %s291, 4
      %s293 = scalar_lea.vmem %s0, %s292
      %s294 = smul.u32 8, %s21
      %s295 = smul.u32 8, %s21
      %p296 = scmp.lt.s32.totalorder %s20, 1
      %s297 = scalar_select %p296, %s20, 1
      %p298 = scmp.lt.s32.totalorder %s295, 7
      %s299 = scalar_select %p298, %s295, 7
      %s300 = smul.addr %s297, 8
      %s301 = sadd.s32 %s299, %s300
      %s302 = smul.addr %s301, 4
      %s303 = scalar_lea.vmem %s1, %s302
      %s304 = smul.u32 8, %s21
      %p305 = scmp.lt.s32.totalorder %s20, 1
      %s306 = scalar_select %p305, %s20, 1
      %s307 = smul.addr %s306, 16
      %s308 = smul.addr %s307, 4
      %s309 = scalar_lea.vmem %s3, %s308
      %s310 = smul.u32 8, %s21
      %p311 = scmp.lt.s32.totalorder %s20, 1
      %s312 = scalar_select %p311, %s20, 1
      %p313 = scmp.lt.s32.totalorder %s310, 7
      %s314 = scalar_select %p313, %s310, 7
      %s315 = smul.addr %s312, 8
      %s316 = sadd.s32 %s314, %s315
      %s317 = smul.addr %s316, 8
      %s318 = scalar_lea.vmem %s5, %s317
      %s319 = smul.u32 8, %s21
      %v321 = vld [vmem:[%s293] sm:$0xf]
      %v322 = vld [vmem:[%s293 + $0x4] sm:$0xf]
      %v323 = vld [vmem:[%s293 + $0x8] sm:$0xf]
      %v324 = vld [vmem:[%s293 + $0xc] sm:$0xf]
      %v325 = vld [vmem:[%s293 + $0x10] sm:$0xf]
      %v326 = vld [vmem:[%s293 + $0x14] sm:$0xf]
      %v327 = vld [vmem:[%s293 + $0x18] sm:$0xf]
      %v328 = vld [vmem:[%s293 + $0x1c] sm:$0xf]
      %v329 = vld [vmem:[%s2] sm:$0xf]
      %v330 = vld [vmem:[%s303] sm:$0xf]
      %v331 = vld [vmem:[%s303 + $0x4] sm:$0xf]
      %v332 = vld [vmem:[%s303 + $0x8] sm:$0xf]
      %v333 = vld [vmem:[%s303 + $0xc] sm:$0xf]
      %v334 = vld [vmem:[%s303 + $0x10] sm:$0xf]
      %v335 = vld [vmem:[%s303 + $0x14] sm:$0xf]
      %v336 = vld [vmem:[%s303 + $0x18] sm:$0xf]
      %v337 = vld [vmem:[%s303 + $0x1c] sm:$0xf]
      %v338 = vld [vmem:[%s309] sm:$0xf]
      %v339 = vld [vmem:[%s309 + $0x4] sm:$0xf]
      %v340 = vld [vmem:[%s309 + $0x8] sm:$0xf]
      %v341 = vld [vmem:[%s309 + $0xc] sm:$0xf]
      %v342 = vld [vmem:[%s309 + $0x10] sm:$0xf]
      %v343 = vld [vmem:[%s309 + $0x14] sm:$0xf]
      %v344 = vld [vmem:[%s309 + $0x18] sm:$0xf]
      %v345 = vld [vmem:[%s309 + $0x1c] sm:$0xf]
      %v346 = vld [vmem:[%s309 + $0x20] sm:$0xf]
      %v347 = vld [vmem:[%s309 + $0x24] sm:$0xf]
      %v348 = vld [vmem:[%s309 + $0x28] sm:$0xf]
      %v349 = vld [vmem:[%s309 + $0x2c] sm:$0xf]
      %v350 = vld [vmem:[%s309 + $0x30] sm:$0xf]
      %v351 = vld [vmem:[%s309 + $0x34] sm:$0xf]
      %v352 = vld [vmem:[%s309 + $0x38] sm:$0xf]
      %v353 = vld [vmem:[%s309 + $0x3c] sm:$0xf]
      %v362 = vunpack.c.l.b16 %v330
      %v363 = vunpack.c.l.b16 %v331
      %v364 = vunpack.c.l.b16 %v332
      %v365 = vunpack.c.l.b16 %v333
      %v366 = vunpack.c.l.b16 %v334
      %v367 = vunpack.c.l.b16 %v335
      %v368 = vunpack.c.l.b16 %v336
      %v369 = vunpack.c.l.b16 %v337
      %v370 = vpack.c.b16 %v363, %v362
      %v371 = vpack.c.b16 %v365, %v364
      %v372 = vpack.c.b16 %v367, %v366
      %v373 = vpack.c.b16 %v369, %v368
      %v394 = vunpack.c.l.b16 %v338
      %v395 = vunpack.c.l.b16 %v339
      %v396 = vunpack.c.l.b16 %v340
      %v397 = vunpack.c.l.b16 %v341
      %v398 = vunpack.c.l.b16 %v342
      %v399 = vunpack.c.l.b16 %v343
      %v400 = vunpack.c.l.b16 %v344
      %v401 = vunpack.c.l.b16 %v345
      %v402 = vunpack.c.l.b16 %v346
      %v403 = vunpack.c.l.b16 %v347
      %v404 = vunpack.c.l.b16 %v348
      %v405 = vunpack.c.l.b16 %v349
      %v406 = vunpack.c.l.b16 %v350
      %v407 = vunpack.c.l.b16 %v351
      %v408 = vunpack.c.l.b16 %v352
      %v409 = vunpack.c.l.b16 %v353
      %v410 = vpack.c.b16 %v395, %v394
      %v411 = vpack.c.b16 %v397, %v396
      %v412 = vpack.c.b16 %v399, %v398
      %v413 = vpack.c.b16 %v401, %v400
      %v414 = vpack.c.b16 %v403, %v402
      %v415 = vpack.c.b16 %v405, %v404
      %v416 = vpack.c.b16 %v407, %v406
      %v417 = vpack.c.b16 %v409, %v408
      %426 = vmatprep.subr.bf16.mxu0 0
      %427 = vmatpush1.bf16.msra.mxu0 %v410
      %428 = vmatprep.subr.bf16.mxu0 0
      %429 = vmatpush1.bf16.msra.mxu0 %v411
      %430 = vmatprep.subr.bf16.mxu0 0
      %431 = vmatpush1.bf16.msra.mxu0 %v412
      %432 = vmatprep.subr.bf16.mxu0 0
      %433 = vmatpush1.bf16.msra.mxu0 %v413
      %434 = vmatprep.subr.bf16.mxu0 0
      %435 = vmatpush1.bf16.msra.mxu0 %v414
      %436 = vmatprep.subr.bf16.mxu0 0
      %437 = vmatpush1.bf16.msra.mxu0 %v415
      %438 = vmatprep.subr.bf16.mxu0 0
      %439 = vmatpush1.bf16.msra.mxu0 %v416
      %440 = vmatprep.subr.bf16.mxu0 0
      %441 = vmatpush1.bf16.msra.mxu0 %v417
      %442 = vmatprep.subr.bf16.mxu0 0
      %443 = vmatpush1.bf16.msra.mxu0 0
      %444 = vmatprep.subr.bf16.mxu0 0
      %445 = vmatpush1.bf16.msra.mxu0 0
      %446 = vmatprep.subr.bf16.mxu0 0
      %447 = vmatpush1.bf16.msra.mxu0 0
      %448 = vmatprep.subr.bf16.mxu0 0
      %449 = vmatpush1.bf16.msra.mxu0 0
      %450 = vmatprep.subr.bf16.mxu0 0
      %451 = vmatpush1.bf16.msra.mxu0 0
      %452 = vmatprep.subr.bf16.mxu0 0
      %453 = vmatpush1.bf16.msra.mxu0 0
      %454 = vmatprep.subr.bf16.mxu0 0
      %455 = vmatpush1.bf16.msra.mxu0 0
      %456 = vmatprep.subr.bf16.mxu0 0
      %457 = vmatpush1.bf16.msra.mxu0 0
      %458 = vmatprep.mubr.bf16.mxu0 0
      %459 = vmatmul.mubr.bf16.gmra.mrb[0].mxu0 %v370
      %v460 = vpop.f32.mrb[0].mxu0
      %v461 = vadd.f32 0.0, %v460
      %v462 = vpop.f32.mrb[0].mxu0
      %v463 = vpop.f32.mrb[0].mxu0
      %v464 = vadd.f32 0.0, %v463
      %v465 = vpop.f32.mrb[0].mxu0
      %466 = vmatprep.mubr.bf16.mxu0 0
      %467 = vmatmul.mubr.bf16.gmra.mrb[0].mxu0 %v371
      %v468 = vpop.f32.mrb[0].mxu0
      %v469 = vadd.f32 0.0, %v468
      %v470 = vpop.f32.mrb[0].mxu0
      %v471 = vpop.f32.mrb[0].mxu0
      %v472 = vadd.f32 0.0, %v471
      %v473 = vpop.f32.mrb[0].mxu0
      %474 = vmatprep.mubr.bf16.mxu0 0
      %475 = vmatmul.mubr.bf16.gmra.mrb[0].mxu0 %v372
      %v476 = vpop.f32.mrb[0].mxu0
      %v477 = vadd.f32 0.0, %v476
      %v478 = vpop.f32.mrb[0].mxu0
      %v479 = vpop.f32.mrb[0].mxu0
      %v480 = vadd.f32 0.0, %v479
      %v481 = vpop.f32.mrb[0].mxu0
      %482 = vmatprep.mubr.bf16.mxu0 0
      %483 = vmatmul.mubr.bf16.gmra.mrb[0].mxu0 %v373
      %v484 = vpop.f32.mrb[0].mxu0
      %v485 = vadd.f32 0.0, %v484
      %v486 = vpop.f32.mrb[0].mxu0
      %v487 = vpop.f32.mrb[0].mxu0
      %v488 = vadd.f32 0.0, %v487
      %v489 = vpop.f32.mrb[0].mxu0
      %490 = vdwg.mxu0
      %v499 = vunpack.c.l.b16 %v321
      %v500 = vunpack.c.l.b16 %v322
      %v501 = vunpack.c.l.b16 %v323
      %v502 = vunpack.c.l.b16 %v324
      %v503 = vunpack.c.l.b16 %v325
      %v504 = vunpack.c.l.b16 %v326
      %v505 = vunpack.c.l.b16 %v327
      %v506 = vunpack.c.l.b16 %v328
      %v507 = vpack.c.b16 %v500, %v499
      %v508 = vpack.c.b16 %v502, %v501
      %v509 = vpack.c.b16 %v504, %v503
      %v510 = vpack.c.b16 %v506, %v505
      %vm511 = vcmask 64512
      %v513 = vsel %vm511, %v507, 0
      %v516 = vsel %vm511, %v508, 0
      %v519 = vsel %vm511, %v509, 0
      %v522 = vsel %vm511, %v510, 0
      %vm524 = vcmask 1043456
      %v526 = vsel %vm524, %v329, 0
      %528 = vmatprep.subr.bf16.mxu0 0
      %529 = vmatpush1.bf16.msra.mxu0 %v526
      %530 = vmatprep.subr.bf16.mxu0 0
      %531 = vmatpush1.bf16.msra.mxu0 0
      %532 = vmatprep.subr.bf16.mxu0 0
      %533 = vmatpush1.bf16.msra.mxu0 0
      %534 = vmatprep.subr.bf16.mxu0 0
      %535 = vmatpush1.bf16.msra.mxu0 0
      %536 = vmatprep.subr.bf16.mxu0 0
      %537 = vmatpush1.bf16.msra.mxu0 0
      %538 = vmatprep.subr.bf16.mxu0 0
      %539 = vmatpush1.bf16.msra.mxu0 0
      %540 = vmatprep.subr.bf16.mxu0 0
      %541 = vmatpush1.bf16.msra.mxu0 0
      %542 = vmatprep.subr.bf16.mxu0 0
      %543 = vmatpush1.bf16.msra.mxu0 0
      %544 = vmatprep.subr.bf16.mxu0 0
      %545 = vmatpush1.bf16.msra.mxu0 0
      %546 = vmatprep.subr.bf16.mxu0 0
      %547 = vmatpush1.bf16.msra.mxu0 0
      %548 = vmatprep.subr.bf16.mxu0 0
      %549 = vmatpush1.bf16.msra.mxu0 0
      %550 = vmatprep.subr.bf16.mxu0 0
      %551 = vmatpush1.bf16.msra.mxu0 0
      %552 = vmatprep.subr.bf16.mxu0 0
      %553 = vmatpush1.bf16.msra.mxu0 0
      %554 = vmatprep.subr.bf16.mxu0 0
      %555 = vmatpush1.bf16.msra.mxu0 0
      %556 = vmatprep.subr.bf16.mxu0 0
      %557 = vmatpush1.bf16.msra.mxu0 0
      %558 = vmatprep.subr.bf16.mxu0 0
      %559 = vmatpush1.bf16.msra.mxu0 0
      %560 = vmatprep.mubr.bf16.mxu0 0
      %561 = vmatmul.mubr.bf16.gmra.mrb[0].mxu0 %v513
      %v562 = vpop.f32.mrb[0].mxu0
      %v563 = vadd.f32 %v461, %v562
      %v564 = vpop.f32.mrb[0].mxu0
      %v565 = vpop.f32.mrb[0].mxu0
      %v566 = vadd.f32 %v464, %v565
      %v567 = vpop.f32.mrb[0].mxu0
      %568 = vmatprep.mubr.bf16.mxu0 0
      %569 = vmatmul.mubr.bf16.gmra.mrb[0].mxu0 %v516
      %v570 = vpop.f32.mrb[0].mxu0
      %v571 = vadd.f32 %v469, %v570
      %v572 = vpop.f32.mrb[0].mxu0
      %v573 = vpop.f32.mrb[0].mxu0
      %v574 = vadd.f32 %v472, %v573
      %v575 = vpop.f32.mrb[0].mxu0
      %576 = vmatprep.mubr.bf16.mxu0 0
      %577 = vmatmul.mubr.bf16.gmra.mrb[0].mxu0 %v519
      %v578 = vpop.f32.mrb[0].mxu0
      %v579 = vadd.f32 %v477, %v578
      %v580 = vpop.f32.mrb[0].mxu0
      %v581 = vpop.f32.mrb[0].mxu0
      %v582 = vadd.f32 %v480, %v581
      %v583 = vpop.f32.mrb[0].mxu0
      %584 = vmatprep.mubr.bf16.mxu0 0
      %585 = vmatmul.mubr.bf16.gmra.mrb[0].mxu0 %v522
      %v586 = vpop.f32.mrb[0].mxu0
      %v587 = vadd.f32 %v485, %v586
      %v588 = vpop.f32.mrb[0].mxu0
      %v589 = vpop.f32.mrb[0].mxu0
      %v590 = vadd.f32 %v488, %v589
      %v591 = vpop.f32.mrb[0].mxu0
      %592 = vdwg.mxu0
      %v593 = vld [vmem:[%s4] sm:$0x1]
      %v595 = vlaneseq
      %v596 = vshrl.u32 %v595, 7
      %v597 = vsub.s32 0, %v596
      %v598 = vrot.slane %v593, %v597
      %v600 = vadd.f32 %v563, %v598
      %v601 = vadd.f32 %v566, %v598
      %v602 = vadd.f32 %v571, %v598
      %v603 = vadd.f32 %v574, %v598
      %v604 = vadd.f32 %v579, %v598
      %v605 = vadd.f32 %v582, %v598
      %v606 = vadd.f32 %v587, %v598
      %v607 = vadd.f32 %v590, %v598
      %vm608 = vcmask 48128
      %609 = vst.msk [vmem:[%s318] sm:$0xff] %vm608, %v600
      %610 = vst.msk [vmem:[%s318 + $0x8] sm:$0xff] %vm608, %v601
      %611 = vst.msk [vmem:[%s318 + $0x10] sm:$0xff] %vm608, %v602
      %612 = vst.msk [vmem:[%s318 + $0x18] sm:$0xff] %vm608, %v603
      %613 = vst.msk [vmem:[%s318 + $0x20] sm:$0xff] %vm608, %v604
      %614 = vst.msk [vmem:[%s318 + $0x28] sm:$0xff] %vm608, %v605
      %615 = vst.msk [vmem:[%s318 + $0x30] sm:$0xff] %vm608, %v606
      %616 = vst.msk [vmem:[%s318 + $0x38] sm:$0xff] %vm608, %v607
      %s617 = smul.u32 8, %s21
      %p618 = scmp.lt.s32.totalorder %s20, 1
      %s619 = scalar_select %p618, %s20, 1
      %p620 = scmp.lt.s32.totalorder %s617, 7
      %s621 = scalar_select %p620, %s617, 7
      %s622 = smul.addr %s619, 8
      %s623 = sadd.s32 %s621, %s622
      %s624 = smul.addr %s623, 8
      %s625 = scalar_lea.vmem %s5, %s624
      // Predicated region
      $region41: #{lraspp_forward.3} parent=39 // pred_check
        %p626 = pneg %p172
      $region42: #{lraspp_forward.3} parent=39 // pred_check_branch
        %628 = sbr.rel (%p626) target = $region44
      $region43: #{lraspp_forward.3} parent=39 // pred_region
        %s629 = smul.u32 8, %s21
      $region44: #{lraspp_forward.3} parent=39 // pred_fallthru
        _
    $region40: #{lraspp_forward.3} parent=5 // pred_fallthru
      _
    %p630 = scmp.le.s32.totalorder 2, %s11
    // Predicated region
    $region45: #{lraspp_forward.3} parent=5 // pred_check
      %p631 = pneg %p630
    $region46: #{lraspp_forward.3} parent=5 // pred_check_branch
      %633 = sbr.rel (%p631) target = $region48
    $region47: #{lraspp_forward.3} parent=5 // pred_region
      %s634 = ssub.s32 %s11, 2
      // Predicated region
      $region49: #{lraspp_forward.3} parent=47 // pred_check
        %p635 = pneg %p178
      $region50: #{lraspp_forward.3} parent=47 // pred_check_branch
        %637 = sbr.rel (%p635) target = $region52
      $region51: #{lraspp_forward.3} parent=47 // pred_region
        %s638 = smul.u32 8, %s23
        %p639 = scmp.lt.s32.totalorder %s22, 1
        %s640 = scalar_select %p639, %s22, 1
        %p641 = scmp.lt.s32.totalorder %s638, 7
        %s642 = scalar_select %p641, %s638, 7
        %s643 = smul.addr %s640, 8
        %s644 = sadd.s32 %s642, %s643
        %s645 = smul.addr %s644, 8
        %s646 = scalar_lea.vmem %s5, %s645
      $region52: #{lraspp_forward.3} parent=47 // pred_fallthru
        _
    $region48: #{lraspp_forward.3} parent=5 // pred_fallthru
      _
  $region6: #{lraspp_forward.3} parent=0 // loop_footer
    %s15 = sadd.s32 1, %s11
  $region7: #{lraspp_forward.3} parent=0 // loop_footer_branch
    %10 = sbr.rel target = $region3
  $region8: #{lraspp_forward.3} parent=0 // loop_exit
    _

</llo_original>
